<compile_context>
chip_gen: v6e
topology: v6e:2x2x1
jax: 0.10.0
libtpu: 0.0.40
codegen_flags: <defaults>
</compile_context>

<pallas_src>
import functools

import jax
import jax.numpy as jnp
from jax.experimental import pallas as pl
from jax.experimental.pallas import tpu as pltpu

EPS = 1e-5  # matches torch.nn.BatchNorm1d default


def _round_up(n, m=128):
    return ((n + m - 1) // m) * m


def _pad_to(a, shape):
    pads = [(0, t - s) for s, t in zip(a.shape, shape)]
    return jnp.pad(a, pads)


def _vmem_limit_bytes():
    # Derive per-generation (v7x: 64 MiB/TC, v5e/v6e: 128 MiB); leave headroom
    # for the double-buffered streamed weight blocks.
    try:
        cap = pltpu.get_tpu_info().vmem_capacity_bytes
    except Exception:  # pragma: no cover - conservative fallback
        cap = 64 * 1024 * 1024
    return max(16 * 1024 * 1024, min(int(cap * 3 // 4), 100 * 1024 * 1024))


def mlp_kernel(num_layers, x_ref, w0_ref, *rest):
    """One grid step == one hidden layer; final Linear fused into the last step.

    rest (num_layers > 1): ws_ref, g_ref, be_ref, wf_ref, bf_ref, out_ref, h_scr
    rest (num_layers == 1):         g_ref, be_ref, wf_ref, bf_ref, out_ref, h_scr

      x_ref  : (N, IN_P)      f32   resident across the grid
      w0_ref : (IN_P, H_P)    bf16  resident
      ws_ref : (1, H_P, H_P)  bf16  streamed block for hidden layer l (l >= 1)
      g_ref  : (1, 1, H_P)    f32   gamma row for layer l
      be_ref : (1, 1, H_P)    f32   beta  row for layer l
      wf_ref : (H_P, OUT_P)   bf16  resident
      bf_ref : (1, OUT_P)     f32   resident
      out_ref: (N, OUT_P)     f32   lane-dense output slab (written on last step)
      h_scr  : (N, H_P)       bf16  activation carry across layer steps
    """
    if num_layers > 1:
        ws_ref, g_ref, be_ref, wf_ref, bf_ref, out_ref, h_scr = rest
    else:
        g_ref, be_ref, wf_ref, bf_ref, out_ref, h_scr = rest
        ws_ref = None

    l = pl.program_id(0)
    g = g_ref[0]    # (1, H_P)
    be = be_ref[0]  # (1, H_P)

    def bn_relu(z):
        # Training-mode BatchNorm1d (batch mean, biased batch var), folded into
        # a single scale/shift; var via E[z^2] - mean^2 (one reduce, no full
        # (N, H_P) subtract pass).  All stats in f32; rsqrt on the EUP.
        mean = jnp.mean(z, axis=0, keepdims=True)
        var = jnp.maximum(jnp.mean(z * z, axis=0, keepdims=True) - mean * mean, 0.0)
        scale = g * jax.lax.rsqrt(var + EPS)
        shift = be - mean * scale
        return jnp.maximum(z * scale + shift, 0.0)  # BN + ReLU fused

    @pl.when(l == 0)
    def _():
        # First block: x @ W0 (bias dropped: cancelled by BN mean subtraction).
        z = jnp.dot(x_ref[...].astype(jnp.bfloat16), w0_ref[...],
                    preferred_element_type=jnp.float32)
        h_scr[...] = bn_relu(z).astype(jnp.bfloat16)

    if num_layers > 1:
        @pl.when(l > 0)
        def _():
            # Hidden block l: bf16 activation carry @ streamed bf16 weight.
            z = jnp.dot(h_scr[...], ws_ref[0],
                        preferred_element_type=jnp.float32)
            h_scr[...] = bn_relu(z).astype(jnp.bfloat16)

    @pl.when(l == num_layers - 1)
    def _():
        out_ref[...] = (jnp.dot(h_scr[...], wf_ref[...],
                                preferred_element_type=jnp.float32)
                        + bf_ref[...])


def init_params(key, input_size, hidden_size, num_layers, output_size):
    """PyTorch-style init: U(-1/sqrt(fan_in), 1/sqrt(fan_in)).

    Weights stored (in_features, out_features) so forward is h @ W + b.
    """
    params = {"hidden": [], "final": None}
    fan_in = input_size
    for _ in range(num_layers):
        key, kw, kb = jax.random.split(key, 3)
        bound = 1.0 / jnp.sqrt(fan_in)
        w = jax.random.uniform(kw, (fan_in, hidden_size), jnp.float32, -bound, bound)
        b = jax.random.uniform(kb, (1, hidden_size), jnp.float32, -bound, bound)
        gamma = jnp.ones((1, hidden_size), jnp.float32)
        beta = jnp.zeros((1, hidden_size), jnp.float32)
        params["hidden"].append((w, b, gamma, beta))
        fan_in = hidden_size
    key, kw, kb = jax.random.split(key, 3)
    bound = 1.0 / jnp.sqrt(fan_in)
    wf = jax.random.uniform(kw, (fan_in, output_size), jnp.float32, -bound, bound)
    bf = jax.random.uniform(kb, (1, output_size), jnp.float32, -bound, bound)
    params["final"] = (wf, bf)
    return params


def pack_params(params, num_layers):
    """One-time packing: pad to lane-dense multiples of 128, cast weights to
    bf16, stack hidden weights / gamma / beta.  Hidden Linear biases are
    dropped (exactly cancelled by training-mode BatchNorm)."""
    input_size, hidden_size = params["hidden"][0][0].shape
    output_size = params["final"][0].shape[1]
    in_p, h_p, out_p = _round_up(input_size), _round_up(hidden_size), _round_up(output_size)

    w0 = _pad_to(params["hidden"][0][0], (in_p, h_p)).astype(jnp.bfloat16)
    gammas, betas, w_stack = [], [], []
    for li, (w, _b, g, be) in enumerate(params["hidden"]):
        gammas.append(_pad_to(g, (1, h_p)))
        betas.append(_pad_to(be, (1, h_p)))
        if li > 0:
            w_stack.append(_pad_to(w, (h_p, h_p)).astype(jnp.bfloat16))
    packed = {
        "w0": w0,
        "gamma": jnp.stack(gammas, axis=0),   # (L, 1, H_P) f32
        "beta": jnp.stack(betas, axis=0),     # (L, 1, H_P) f32
        "wf": _pad_to(params["final"][0], (h_p, out_p)).astype(jnp.bfloat16),
        "bf": _pad_to(params["final"][1], (1, out_p)),
        "dims": (input_size, hidden_size, output_size, in_p, h_p, out_p),
    }
    if num_layers > 1:
        packed["w_stack"] = jnp.stack(w_stack, axis=0)  # (L-1, H_P, H_P) bf16
    return packed


def sequential_mlp_forward(x, packed, num_layers):
    input_size, hidden_size, output_size, in_p, h_p, out_p = packed["dims"]
    n = x.shape[0]
    assert x.shape[1] == input_size

    x_p = _pad_to(x, (n, in_p))  # only per-call preprocessing

    inputs = [x_p, packed["w0"]]
    in_specs = [
        pl.BlockSpec((n, in_p), lambda l: (0, 0)),        # x: resident
        pl.BlockSpec((in_p, h_p), lambda l: (0, 0)),      # w0: resident
    ]
    if num_layers > 1:
        inputs.append(packed["w_stack"])
        # Stream one (H_P, H_P) weight block per layer step; clamp so step 0
        # prefetches layer 1's weights while the first block computes.
        in_specs.append(pl.BlockSpec((1, h_p, h_p),
                                     lambda l: (jnp.maximum(l - 1, 0), 0, 0)))
    inputs += [packed["gamma"], packed["beta"], packed["wf"], packed["bf"]]
    in_specs += [
        pl.BlockSpec((1, 1, h_p), lambda l: (l, 0, 0)),   # gamma row of layer l
        pl.BlockSpec((1, 1, h_p), lambda l: (l, 0, 0)),   # beta  row of layer l
        pl.BlockSpec((h_p, out_p), lambda l: (0, 0)),     # wf: resident
        pl.BlockSpec((1, out_p), lambda l: (0, 0)),       # bf: resident
    ]

    kernel = functools.partial(mlp_kernel, num_layers)
    out_padded = pl.pallas_call(
        kernel,
        out_shape=jax.ShapeDtypeStruct((n, out_p), jnp.float32),
        grid=(num_layers,),
        in_specs=in_specs,
        out_specs=pl.BlockSpec((n, out_p), lambda l: (0, 0)),  # resident, lane-dense
        scratch_shapes=[pltpu.VMEM((n, h_p), jnp.bfloat16)],   # activation carry
        compiler_params=pltpu.CompilerParams(
            dimension_semantics=("arbitrary",),   # layer chain is sequential
            vmem_limit_bytes=_vmem_limit_bytes()),
    )(*inputs)
    return out_padded[:, :output_size]


def reference_forward(x, params):
    """Pure-JAX reference faithful to the PyTorch module (hidden biases kept,
    training-mode BatchNorm), with bf16 matmul inputs / f32 accumulation to
    mirror the kernel's MXU precision."""
    h = x
    for (w, b, g, be) in params["hidden"]:
        z = jnp.dot(h.astype(jnp.bfloat16), w.astype(jnp.bfloat16),
                    preferred_element_type=jnp.float32) + b
        mean = jnp.mean(z, axis=0, keepdims=True)
        var = jnp.mean((z - mean) ** 2, axis=0, keepdims=True)
        h = jnp.maximum((z - mean) * jax.lax.rsqrt(var + EPS) * g + be, 0.0)
    wf, bf = params["final"]
    return jnp.dot(h.astype(jnp.bfloat16), wf.astype(jnp.bfloat16),
                   preferred_element_type=jnp.float32) + bf


if __name__ == "__main__":
    # Small shapes consistent with the module: (batch, input_size)
    batch, input_size, hidden_size, num_layers, output_size = 8, 16, 32, 3, 8

    key = jax.random.PRNGKey(0)
    key, kx = jax.random.split(key)
    x = jax.random.normal(kx, (batch, input_size), jnp.float32)

    params = init_params(key, input_size, hidden_size, num_layers, output_size)
    packed = pack_params(params, num_layers)      # one-time, off the hot path

    out = sequential_mlp_forward(x, packed, num_layers)
    out = jax.block_until_ready(out)

    ref = reference_forward(x, params)
    assert out.shape == (batch, output_size)
    assert jnp.allclose(out, ref, atol=1e-3, rtol=1e-3), "mismatch vs reference"

    print("KERNEL_OK")
</pallas_src>

<mosaic_0001>
module attributes {stable_mosaic.version = 11 : i64} {
  func.func @mlp_kernel(%arg0: i32, %arg1: memref<8x128xf32, #tpu.memory_space<vmem>>, %arg2: memref<128x128xbf16, #tpu.memory_space<vmem>>, %arg3: memref<1x128x128xbf16, #tpu.memory_space<vmem>>, %arg4: memref<1x1x128xf32, #tpu.memory_space<vmem>>, %arg5: memref<1x1x128xf32, #tpu.memory_space<vmem>>, %arg6: memref<128x128xbf16, #tpu.memory_space<vmem>>, %arg7: memref<1x128xf32, #tpu.memory_space<vmem>>, %arg8: memref<8x128xf32, #tpu.memory_space<vmem>>, %arg9: memref<8x128xbf16, #tpu.memory_space<vmem>>) attributes {dimension_semantics = [#tpu.dimension_semantics<arbitrary>], iteration_bounds = array<i64: 3>, scalar_prefetch = 0 : i64, scratch_operands = 1 : i64, tpu.core_type = #tpu.core_type<tc>, window_params = [{pipeline_mode = #tpu.pipeline_mode<synchronous>, transform_indices = @transform_0, window_bounds = array<i64: 8, 128>}, {pipeline_mode = #tpu.pipeline_mode<synchronous>, transform_indices = @transform_1, window_bounds = array<i64: 128, 128>}, {transform_indices = @transform_2, window_bounds = array<i64: 1, 128, 128>}, {transform_indices = @transform_3, window_bounds = array<i64: 1, 1, 128>}, {transform_indices = @transform_4, window_bounds = array<i64: 1, 1, 128>}, {pipeline_mode = #tpu.pipeline_mode<synchronous>, transform_indices = @transform_5, window_bounds = array<i64: 128, 128>}, {pipeline_mode = #tpu.pipeline_mode<synchronous>, transform_indices = @transform_6, window_bounds = array<i64: 1, 128>}, {pipeline_mode = #tpu.pipeline_mode<synchronous>, transform_indices = @transform_7, window_bounds = array<i64: 8, 128>}]} {
    %c0 = arith.constant 0 : index
    %c0_0 = arith.constant 0 : index
    %c0_1 = arith.constant 0 : index
    %0 = vector.load %arg4[%c0, %c0_0, %c0_1] : memref<1x1x128xf32, #tpu.memory_space<vmem>>, vector<1x1x128xf32>
    %1 = vector.shape_cast %0 : vector<1x1x128xf32> to vector<1x128xf32>
    %c0_2 = arith.constant 0 : index
    %c0_3 = arith.constant 0 : index
    %c0_4 = arith.constant 0 : index
    %2 = vector.load %arg5[%c0_2, %c0_3, %c0_4] : memref<1x1x128xf32, #tpu.memory_space<vmem>>, vector<1x1x128xf32>
    %3 = vector.shape_cast %2 : vector<1x1x128xf32> to vector<1x128xf32>
    %c0_i32 = arith.constant 0 : i32
    %4 = arith.cmpi eq, %arg0, %c0_i32 : i32
    %5 = arith.extui %4 : i1 to i32
    %c0_i32_5 = arith.constant 0 : i32
    %6 = arith.cmpi ne, %5, %c0_i32_5 : i32
    scf.if %6 {
      %c0_9 = arith.constant 0 : index
      %c0_10 = arith.constant 0 : index
      %13 = vector.load %arg1[%c0_9, %c0_10] : memref<8x128xf32, #tpu.memory_space<vmem>>, vector<8x128xf32>
      %14 = arith.truncf %13 : vector<8x128xf32> to vector<8x128xbf16>
      %c0_11 = arith.constant 0 : index
      %c0_12 = arith.constant 0 : index
      %15 = vector.load %arg2[%c0_11, %c0_12] : memref<128x128xbf16, #tpu.memory_space<vmem>>, vector<128x128xbf16>
      %cst = arith.constant dense<0.000000e+00> : vector<8x128xf32>
      %16 = tpu.matmul %14, %15, %cst {dimension_numbers = #tpu.dot_dimension_numbers<[1], [0], [0], [1], [0, 0, 1, 1], [], []>} : vector<8x128xbf16>, vector<128x128xbf16>, vector<8x128xf32> -> vector<8x128xf32>
      %cst_13 = arith.constant dense<0.000000e+00> : vector<128xf32>
      %17 = vector.multi_reduction <add>, %16, %cst_13 [0] : vector<8x128xf32> to vector<128xf32>
      %18 = vector.shape_cast %17 : vector<128xf32> to vector<1x128xf32>
      %cst_14 = arith.constant 8.000000e+00 : f32
      %19 = vector.broadcast %cst_14 : f32 to vector<1x128xf32>
      %20 = arith.divf %18, %19 : vector<1x128xf32>
      %21 = arith.mulf %16, %16 : vector<8x128xf32>
      %cst_15 = arith.constant dense<0.000000e+00> : vector<128xf32>
      %22 = vector.multi_reduction <add>, %21, %cst_15 [0] : vector<8x128xf32> to vector<128xf32>
      %23 = vector.shape_cast %22 : vector<128xf32> to vector<1x128xf32>
      %cst_16 = arith.constant 8.000000e+00 : f32
      %24 = vector.broadcast %cst_16 : f32 to vector<1x128xf32>
      %25 = arith.divf %23, %24 : vector<1x128xf32>
      %26 = arith.mulf %20, %20 : vector<1x128xf32>
      %27 = arith.subf %25, %26 : vector<1x128xf32>
      %cst_17 = arith.constant 0.000000e+00 : f32
      %28 = vector.broadcast %cst_17 : f32 to vector<1x128xf32>
      %29 = arith.maximumf %27, %28 : vector<1x128xf32>
      %cst_18 = arith.constant 9.99999974E-6 : f32
      %30 = vector.broadcast %cst_18 : f32 to vector<1x128xf32>
      %31 = arith.addf %29, %30 : vector<1x128xf32>
      %32 = math.rsqrt %31 : vector<1x128xf32>
      %33 = arith.mulf %1, %32 : vector<1x128xf32>
      %34 = arith.mulf %20, %33 : vector<1x128xf32>
      %35 = arith.subf %3, %34 : vector<1x128xf32>
      %36 = vector.broadcast %33 : vector<1x128xf32> to vector<8x128xf32>
      %37 = arith.mulf %16, %36 : vector<8x128xf32>
      %38 = vector.broadcast %35 : vector<1x128xf32> to vector<8x128xf32>
      %39 = arith.addf %37, %38 : vector<8x128xf32>
      %cst_19 = arith.constant 0.000000e+00 : f32
      %40 = vector.broadcast %cst_19 : f32 to vector<8x128xf32>
      %41 = arith.maximumf %39, %40 : vector<8x128xf32>
      %42 = arith.truncf %41 : vector<8x128xf32> to vector<8x128xbf16>
      %c0_20 = arith.constant 0 : index
      %c0_21 = arith.constant 0 : index
      %43 = vector.load %arg9[%c0_20, %c0_21] : memref<8x128xbf16, #tpu.memory_space<vmem>>, vector<8x128xbf16>
      tpu.vector_store %arg9[%c0_20, %c0_21], %42 {strides = array<i32>} : memref<8x128xbf16, #tpu.memory_space<vmem>>, vector<8x128xbf16>,
    } else {
    }
    %c0_i32_6 = arith.constant 0 : i32
    %7 = arith.cmpi sgt, %arg0, %c0_i32_6 : i32
    %8 = arith.extui %7 : i1 to i32
    %c0_i32_7 = arith.constant 0 : i32
    %9 = arith.cmpi ne, %8, %c0_i32_7 : i32
    scf.if %9 {
      %c0_9 = arith.constant 0 : index
      %c0_10 = arith.constant 0 : index
      %13 = vector.load %arg9[%c0_9, %c0_10] : memref<8x128xbf16, #tpu.memory_space<vmem>>, vector<8x128xbf16>
      %c0_11 = arith.constant 0 : index
      %c0_12 = arith.constant 0 : index
      %c0_13 = arith.constant 0 : index
      %14 = vector.load %arg3[%c0_11, %c0_12, %c0_13] : memref<1x128x128xbf16, #tpu.memory_space<vmem>>, vector<1x128x128xbf16>
      %15 = vector.shape_cast %14 : vector<1x128x128xbf16> to vector<128x128xbf16>
      %cst = arith.constant dense<0.000000e+00> : vector<8x128xf32>
      %16 = tpu.matmul %13, %15, %cst {dimension_numbers = #tpu.dot_dimension_numbers<[1], [0], [0], [1], [0, 0, 1, 1], [], []>} : vector<8x128xbf16>, vector<128x128xbf16>, vector<8x128xf32> -> vector<8x128xf32>
      %cst_14 = arith.constant dense<0.000000e+00> : vector<128xf32>
      %17 = vector.multi_reduction <add>, %16, %cst_14 [0] : vector<8x128xf32> to vector<128xf32>
      %18 = vector.shape_cast %17 : vector<128xf32> to vector<1x128xf32>
      %cst_15 = arith.constant 8.000000e+00 : f32
      %19 = vector.broadcast %cst_15 : f32 to vector<1x128xf32>
      %20 = arith.divf %18, %19 : vector<1x128xf32>
      %21 = arith.mulf %16, %16 : vector<8x128xf32>
      %cst_16 = arith.constant dense<0.000000e+00> : vector<128xf32>
      %22 = vector.multi_reduction <add>, %21, %cst_16 [0] : vector<8x128xf32> to vector<128xf32>
      %23 = vector.shape_cast %22 : vector<128xf32> to vector<1x128xf32>
      %cst_17 = arith.constant 8.000000e+00 : f32
      %24 = vector.broadcast %cst_17 : f32 to vector<1x128xf32>
      %25 = arith.divf %23, %24 : vector<1x128xf32>
      %26 = arith.mulf %20, %20 : vector<1x128xf32>
      %27 = arith.subf %25, %26 : vector<1x128xf32>
      %cst_18 = arith.constant 0.000000e+00 : f32
      %28 = vector.broadcast %cst_18 : f32 to vector<1x128xf32>
      %29 = arith.maximumf %27, %28 : vector<1x128xf32>
      %cst_19 = arith.constant 9.99999974E-6 : f32
      %30 = vector.broadcast %cst_19 : f32 to vector<1x128xf32>
      %31 = arith.addf %29, %30 : vector<1x128xf32>
      %32 = math.rsqrt %31 : vector<1x128xf32>
      %33 = arith.mulf %1, %32 : vector<1x128xf32>
      %34 = arith.mulf %20, %33 : vector<1x128xf32>
      %35 = arith.subf %3, %34 : vector<1x128xf32>
      %36 = vector.broadcast %33 : vector<1x128xf32> to vector<8x128xf32>
      %37 = arith.mulf %16, %36 : vector<8x128xf32>
      %38 = vector.broadcast %35 : vector<1x128xf32> to vector<8x128xf32>
      %39 = arith.addf %37, %38 : vector<8x128xf32>
      %cst_20 = arith.constant 0.000000e+00 : f32
      %40 = vector.broadcast %cst_20 : f32 to vector<8x128xf32>
      %41 = arith.maximumf %39, %40 : vector<8x128xf32>
      %42 = arith.truncf %41 : vector<8x128xf32> to vector<8x128xbf16>
      %c0_21 = arith.constant 0 : index
      %c0_22 = arith.constant 0 : index
      %43 = vector.load %arg9[%c0_21, %c0_22] : memref<8x128xbf16, #tpu.memory_space<vmem>>, vector<8x128xbf16>
      tpu.vector_store %arg9[%c0_21, %c0_22], %42 {strides = array<i32>} : memref<8x128xbf16, #tpu.memory_space<vmem>>, vector<8x128xbf16>,
    } else {
    }
    %c2_i32 = arith.constant 2 : i32
    %10 = arith.cmpi eq, %arg0, %c2_i32 : i32
    %11 = arith.extui %10 : i1 to i32
    %c0_i32_8 = arith.constant 0 : i32
    %12 = arith.cmpi ne, %11, %c0_i32_8 : i32
    scf.if %12 {
      %c0_9 = arith.constant 0 : index
      %c0_10 = arith.constant 0 : index
      %13 = vector.load %arg9[%c0_9, %c0_10] : memref<8x128xbf16, #tpu.memory_space<vmem>>, vector<8x128xbf16>
      %c0_11 = arith.constant 0 : index
      %c0_12 = arith.constant 0 : index
      %14 = vector.load %arg6[%c0_11, %c0_12] : memref<128x128xbf16, #tpu.memory_space<vmem>>, vector<128x128xbf16>
      %cst = arith.constant dense<0.000000e+00> : vector<8x128xf32>
      %15 = tpu.matmul %13, %14, %cst {dimension_numbers = #tpu.dot_dimension_numbers<[1], [0], [0], [1], [0, 0, 1, 1], [], []>} : vector<8x128xbf16>, vector<128x128xbf16>, vector<8x128xf32> -> vector<8x128xf32>
      %c0_13 = arith.constant 0 : index
      %c0_14 = arith.constant 0 : index
      %16 = vector.load %arg7[%c0_13, %c0_14] : memref<1x128xf32, #tpu.memory_space<vmem>>, vector<1x128xf32>
      %17 = vector.broadcast %16 : vector<1x128xf32> to vector<8x128xf32>
      %18 = arith.addf %15, %17 : vector<8x128xf32>
      %c0_15 = arith.constant 0 : index
      %c0_16 = arith.constant 0 : index
      %19 = vector.load %arg8[%c0_15, %c0_16] : memref<8x128xf32, #tpu.memory_space<vmem>>, vector<8x128xf32>
      tpu.vector_store %arg8[%c0_15, %c0_16], %18 {strides = array<i32>} : memref<8x128xf32, #tpu.memory_space<vmem>>, vector<8x128xf32>,
    } else {
    }
    return
  }
  func.func @transform_0(%arg0: i32) -> (i32, i32) {
    %c0_i32 = arith.constant 0 : i32
    %c0_i32_0 = arith.constant 0 : i32
    %c0_i32_1 = arith.constant 0 : i32
    return %c0_i32, %c0_i32_0 : i32, i32
  }
  func.func @transform_1(%arg0: i32) -> (i32, i32) {
    %c0_i32 = arith.constant 0 : i32
    %c0_i32_0 = arith.constant 0 : i32
    %c0_i32_1 = arith.constant 0 : i32
    return %c0_i32, %c0_i32_0 : i32, i32
  }
  func.func @transform_2(%arg0: i32) -> (i32, i32, i32) {
    %c1_i32 = arith.constant 1 : i32
    %0 = arith.subi %arg0, %c1_i32 : i32
    %c0_i32 = arith.constant 0 : i32
    %1 = arith.maxsi %0, %c0_i32 : i32
    %c0_i32_0 = arith.constant 0 : i32
    %c0_i32_1 = arith.constant 0 : i32
    %c0_i32_2 = arith.constant 0 : i32
    return %1, %c0_i32_0, %c0_i32_1 : i32, i32, i32
  }
  func.func @transform_3(%arg0: i32) -> (i32, i32, i32) {
    %c0_i32 = arith.constant 0 : i32
    %c0_i32_0 = arith.constant 0 : i32
    %c0_i32_1 = arith.constant 0 : i32
    return %arg0, %c0_i32, %c0_i32_0 : i32, i32, i32
  }
  func.func @transform_4(%arg0: i32) -> (i32, i32, i32) {
    %c0_i32 = arith.constant 0 : i32
    %c0_i32_0 = arith.constant 0 : i32
    %c0_i32_1 = arith.constant 0 : i32
    return %arg0, %c0_i32, %c0_i32_0 : i32, i32, i32
  }
  func.func @transform_5(%arg0: i32) -> (i32, i32) {
    %c0_i32 = arith.constant 0 : i32
    %c0_i32_0 = arith.constant 0 : i32
    %c0_i32_1 = arith.constant 0 : i32
    return %c0_i32, %c0_i32_0 : i32, i32
  }
  func.func @transform_6(%arg0: i32) -> (i32, i32) {
    %c0_i32 = arith.constant 0 : i32
    %c0_i32_0 = arith.constant 0 : i32
    %c0_i32_1 = arith.constant 0 : i32
    return %c0_i32, %c0_i32_0 : i32, i32
  }
  func.func @transform_7(%arg0: i32) -> (i32, i32) {
    %c0_i32 = arith.constant 0 : i32
    %c0_i32_0 = arith.constant 0 : i32
    %c0_i32_1 = arith.constant 0 : i32
    return %c0_i32, %c0_i32_0 : i32, i32
  }
}

</mosaic_0001>

<llo_original>
// kernel: tpu_custom_call.1
$region0: #{tpu_custom_call.1}
  #allocation0 [shape = 'u32[]', space=smem, size = 0x4, offset = 0x4, fixed_abs, tag = 'smem constant byte address 0x4 - core index']
  #allocation1 [shape = 'u32[144,128]{1,0:T(1,128)}', space=vmem, size = 0x12000, scoped, tag = 'internal scratch']
  #allocation2 [shape = 'bf16[8,128]{1,0:T(8,128)(2,1)}', space=vmem, size = 0x800, scoped, tag = 'scratch operand']
  %s0 = inlined_call_operand.hbm [shape: f32[8,128], index: 0, kind: input, shape index: {}]
  %s1 = inlined_call_operand.hbm [shape: bf16[128,128], index: 1, kind: input, shape index: {}]
  %s2 = inlined_call_operand.hbm [shape: bf16[2,128,128], index: 2, kind: input, shape index: {}]
  %s3 = inlined_call_operand.vmem [shape: f32[3,1,128], index: 3, kind: input, shape index: {}]
  %s4 = inlined_call_operand.vmem [shape: f32[3,1,128], index: 4, kind: input, shape index: {}]
  %s5 = inlined_call_operand.hbm [shape: bf16[128,128], index: 5, kind: input, shape index: {}]
  %s6 = inlined_call_operand.vmem [shape: f32[1,128], index: 6, kind: input, shape index: {}]
  %s7 = inlined_call_operand.hbm [shape: f32[8,128], index: 7, kind: output, shape index: {}]
  %s8 = sld [smem:[#allocation0]]
  $region89: #{tpu_custom_call.1} parent=0
    _
  %s10 = ssub.s32 1, %s8
  %s11 = scalar_select 0, %s10, %s8
  $region1: #{tpu_custom_call.1} parent=0
    #allocation3 [shape = 'u8[4096]{0}', space=vmem, size = 0x1000, scoped, tag = 'input window, operand 0, single buffered']
    #allocation4 [shape = 's32[2]{0}', space=sflag, size = 0x8, scoped, tag = 'scoped memory for tpu_custom_call.1']
    #allocation5 [shape = 's32[2]{0}', space=sflag, size = 0x8, scoped, tag = 'scoped memory for tpu_custom_call.1']
    #allocation6 [shape = 'u8[32768]{0}', space=vmem, size = 0x8000, scoped, tag = 'input window, operand 1, single buffered']
    #allocation7 [shape = 's32[1]{0}', space=sflag, size = 0x4, scoped, tag = 'scoped memory for tpu_custom_call.1']
    #allocation8 [shape = 'u8[65536]{0}', space=vmem, size = 0x10000, scoped, tag = 'input window, operand 2']
    #allocation9 [shape = 'u8[32768]{0}', space=vmem, size = 0x8000, scoped, tag = 'input window, operand 5, single buffered']
    #allocation10 [shape = 'u8[4096]{0}', space=vmem, size = 0x1000, scoped, tag = 'output window, operand 0, single buffered']
    %12 = vsyncpa [#allocation4], 0
    %13 = vsyncpa [#allocation7], 0
    %14 = vsyncpa [#allocation5], 0
    loop: start=0, step=1, limit=5
    $region2: #{tpu_custom_call.1} parent=1 // loop_pre_header
      _
    $region3: #{tpu_custom_call.1} parent=1 // loop_header
      %s16 = sphi 0, %s20
      %p17 = scmp.ge.s32.totalorder %s16, 5
      %s24 = sphi 0, %s24
      %s26 = sphi 0, %s24
      %s27 = sphi 0, %s26
      %s41 = sphi 0, %s27
      %s45 = sphi 0, %s45
      %s47 = sphi 0, %s45
      %s48 = sphi 0, %s47
      %s62 = sphi 0, %s48
      %s74 = sphi 0, %s76
      %s77 = sphi 0, %s74
      %s78 = sphi 0, %s77
      %s94 = sphi 0, %s78
      %s100 = sphi 0, %s102
      %s103 = sphi 0, %s100
      %s104 = sphi 0, %s103
      %s120 = sphi 0, %s104
      %s126 = sphi 0, %s128
      %s129 = sphi 0, %s126
      %s130 = sphi 0, %s129
      %s146 = sphi 0, %s130
      %s150 = sphi 0, %s150
      %s152 = sphi 0, %s150
      %s153 = sphi 0, %s152
      %s167 = sphi 0, %s153
      %s171 = sphi 0, %s171
      %s173 = sphi 0, %s171
      %s174 = sphi 0, %s173
      %s188 = sphi 0, %s174
      %s192 = sphi 0, %s192
      %s194 = sphi 0, %s192
      %s195 = sphi 0, %s194
      %s209 = sphi 0, %s195
    $region4: #{tpu_custom_call.1} parent=1 // loop_header_branch
      %19 = sbr.rel (%p17) target = $region8
    $region5: #{tpu_custom_call.1} parent=1 // loop_body
      %s21 = ssub.s32 %s16, 1
      %s22 = ssub.s32 %s16, 2
      %s23 = sadd.s32 %s16, 1
      %s25 = sadd.s32 %s24, 1
      %p28 = scmp.eq.s32.totalorder %s16, 2
      %p29 = scmp.ne.s32.totalorder %s24, %s26
      %p30 = scmp.eq.s32.totalorder %s16, 0
      %p31 = por %p29, %p30
      %p32 = scmp.ne.s32.totalorder %s24, %s26
      %p33 = scmp.eq.s32.totalorder %s21, 2
      %p34 = por %p32, %p33
      %p35 = scmp.ne.s32.totalorder %s26, %s27
      %p36 = scmp.eq.s32.totalorder %s21, 0
      %p37 = por %p35, %p36
      %p38 = scmp.ne.s32.totalorder %s26, %s27
      %p39 = scmp.eq.s32.totalorder %s22, 2
      %p40 = por %p38, %p39
      %p42 = scmp.ne.s32.totalorder %s27, %s41
      %p43 = scmp.eq.s32.totalorder %s22, 0
      %p44 = por %p42, %p43
      %s46 = sadd.s32 %s45, 1
      %p49 = scmp.eq.s32.totalorder %s16, 2
      %p50 = scmp.ne.s32.totalorder %s45, %s47
      %p51 = scmp.eq.s32.totalorder %s16, 0
      %p52 = por %p50, %p51
      %p53 = scmp.ne.s32.totalorder %s45, %s47
      %p54 = scmp.eq.s32.totalorder %s21, 2
      %p55 = por %p53, %p54
      %p56 = scmp.ne.s32.totalorder %s47, %s48
      %p57 = scmp.eq.s32.totalorder %s21, 0
      %p58 = por %p56, %p57
      %p59 = scmp.ne.s32.totalorder %s47, %s48
      %p60 = scmp.eq.s32.totalorder %s22, 2
      %p61 = por %p59, %p60
      %p63 = scmp.ne.s32.totalorder %s48, %s62
      %p64 = scmp.eq.s32.totalorder %s22, 0
      %p65 = por %p63, %p64
      %s66 = ssub.s32 %s16, 1
      %p67 = scmp.gt.s32.totalorder %s66, 0
      %s68 = scalar_select %p67, %s66, 0
      %s69 = ssub.s32 %s23, 1
      %p70 = scmp.gt.s32.totalorder %s69, 0
      %s71 = scalar_select %p70, %s69, 0
      %s72 = ssub.s32 %s68, %s71
      %p73 = scmp.eq.s32.totalorder %s72, 0
      %s75 = sadd.s32 %s74, 1
      %s76 = scalar_select %p73, %s74, %s75
      %p79 = pneg %p73
      %p80 = scmp.eq.s32.totalorder %s16, 2
      %p81 = por %p79, %p80
      %p82 = scmp.ne.s32.totalorder %s74, %s77
      %p83 = scmp.eq.s32.totalorder %s16, 0
      %p84 = por %p82, %p83
      %p85 = scmp.ne.s32.totalorder %s74, %s77
      %p86 = scmp.eq.s32.totalorder %s21, 2
      %p87 = por %p85, %p86
      %p88 = scmp.ne.s32.totalorder %s77, %s78
      %p89 = scmp.eq.s32.totalorder %s21, 0
      %p90 = por %p88, %p89
      %p91 = scmp.ne.s32.totalorder %s77, %s78
      %p92 = scmp.eq.s32.totalorder %s22, 2
      %p93 = por %p91, %p92
      %p95 = scmp.ne.s32.totalorder %s78, %s94
      %p96 = scmp.eq.s32.totalorder %s22, 0
      %p97 = por %p95, %p96
      %s98 = ssub.s32 %s16, %s23
      %p99 = scmp.eq.s32.totalorder %s98, 0
      %s101 = sadd.s32 %s100, 1
      %s102 = scalar_select %p99, %s100, %s101
      %p105 = pneg %p99
      %p106 = scmp.eq.s32.totalorder %s16, 2
      %p107 = por %p105, %p106
      %p108 = scmp.ne.s32.totalorder %s100, %s103
      %p109 = scmp.eq.s32.totalorder %s16, 0
      %p110 = por %p108, %p109
      %p111 = scmp.ne.s32.totalorder %s100, %s103
      %p112 = scmp.eq.s32.totalorder %s21, 2
      %p113 = por %p111, %p112
      %p114 = scmp.ne.s32.totalorder %s103, %s104
      %p115 = scmp.eq.s32.totalorder %s21, 0
      %p116 = por %p114, %p115
      %p117 = scmp.ne.s32.totalorder %s103, %s104
      %p118 = scmp.eq.s32.totalorder %s22, 2
      %p119 = por %p117, %p118
      %p121 = scmp.ne.s32.totalorder %s104, %s120
      %p122 = scmp.eq.s32.totalorder %s22, 0
      %p123 = por %p121, %p122
      %s124 = ssub.s32 %s16, %s23
      %p125 = scmp.eq.s32.totalorder %s124, 0
      %s127 = sadd.s32 %s126, 1
      %s128 = scalar_select %p125, %s126, %s127
      %p131 = pneg %p125
      %p132 = scmp.eq.s32.totalorder %s16, 2
      %p133 = por %p131, %p132
      %p134 = scmp.ne.s32.totalorder %s126, %s129
      %p135 = scmp.eq.s32.totalorder %s16, 0
      %p136 = por %p134, %p135
      %p137 = scmp.ne.s32.totalorder %s126, %s129
      %p138 = scmp.eq.s32.totalorder %s21, 2
      %p139 = por %p137, %p138
      %p140 = scmp.ne.s32.totalorder %s129, %s130
      %p141 = scmp.eq.s32.totalorder %s21, 0
      %p142 = por %p140, %p141
      %p143 = scmp.ne.s32.totalorder %s129, %s130
      %p144 = scmp.eq.s32.totalorder %s22, 2
      %p145 = por %p143, %p144
      %p147 = scmp.ne.s32.totalorder %s130, %s146
      %p148 = scmp.eq.s32.totalorder %s22, 0
      %p149 = por %p147, %p148
      %s151 = sadd.s32 %s150, 1
      %p154 = scmp.eq.s32.totalorder %s16, 2
      %p155 = scmp.ne.s32.totalorder %s150, %s152
      %p156 = scmp.eq.s32.totalorder %s16, 0
      %p157 = por %p155, %p156
      %p158 = scmp.ne.s32.totalorder %s150, %s152
      %p159 = scmp.eq.s32.totalorder %s21, 2
      %p160 = por %p158, %p159
      %p161 = scmp.ne.s32.totalorder %s152, %s153
      %p162 = scmp.eq.s32.totalorder %s21, 0
      %p163 = por %p161, %p162
      %p164 = scmp.ne.s32.totalorder %s152, %s153
      %p165 = scmp.eq.s32.totalorder %s22, 2
      %p166 = por %p164, %p165
      %p168 = scmp.ne.s32.totalorder %s153, %s167
      %p169 = scmp.eq.s32.totalorder %s22, 0
      %p170 = por %p168, %p169
      %s172 = sadd.s32 %s171, 1
      %p175 = scmp.eq.s32.totalorder %s16, 2
      %p176 = scmp.ne.s32.totalorder %s171, %s173
      %p177 = scmp.eq.s32.totalorder %s16, 0
      %p178 = por %p176, %p177
      %p179 = scmp.ne.s32.totalorder %s171, %s173
      %p180 = scmp.eq.s32.totalorder %s21, 2
      %p181 = por %p179, %p180
      %p182 = scmp.ne.s32.totalorder %s173, %s174
      %p183 = scmp.eq.s32.totalorder %s21, 0
      %p184 = por %p182, %p183
      %p185 = scmp.ne.s32.totalorder %s173, %s174
      %p186 = scmp.eq.s32.totalorder %s22, 2
      %p187 = por %p185, %p186
      %p189 = scmp.ne.s32.totalorder %s174, %s188
      %p190 = scmp.eq.s32.totalorder %s22, 0
      %p191 = por %p189, %p190
      %s193 = sadd.s32 %s192, 1
      %p196 = scmp.eq.s32.totalorder %s16, 2
      %p197 = scmp.ne.s32.totalorder %s192, %s194
      %p198 = scmp.eq.s32.totalorder %s16, 0
      %p199 = por %p197, %p198
      %p200 = scmp.ne.s32.totalorder %s192, %s194
      %p201 = scmp.eq.s32.totalorder %s21, 2
      %p202 = por %p200, %p201
      %p203 = scmp.ne.s32.totalorder %s194, %s195
      %p204 = scmp.eq.s32.totalorder %s21, 0
      %p205 = por %p203, %p204
      %p206 = scmp.ne.s32.totalorder %s194, %s195
      %p207 = scmp.eq.s32.totalorder %s22, 2
      %p208 = por %p206, %p207
      %p210 = scmp.ne.s32.totalorder %s195, %s209
      %p211 = scmp.eq.s32.totalorder %s22, 0
      %p212 = por %p210, %p211
      %p213 = scmp.le.s32.totalorder 1, %s16
      %p214 = scmp.lt.s32.totalorder %s16, 4
      %p215 = pnand %p213, %p214
      %p216 = pneg %p215
      // Predicated region
      $region9: #{tpu_custom_call.1} parent=5 // pred_check
        _
      $region10: #{tpu_custom_call.1} parent=5 // pred_check_branch
        %218 = sbr.rel (%p215) target = $region12
      $region11: #{tpu_custom_call.1} parent=5 // pred_region
        %s219 = ssub.s32 %s16, 1
        // Predicated region
        $region13: #{tpu_custom_call.1} parent=11 // pred_check
          %p220 = pneg %p37
        $region14: #{tpu_custom_call.1} parent=11 // pred_check_branch
          %222 = sbr.rel (%p220) target = $region16
        $region15: #{tpu_custom_call.1} parent=11 // pred_region
          %s224 = ssub.s32 128, 128
          %225 = vsyncadd [#allocation4], %s224
          %s227 = sshll.u32 [#allocation3], 4
          %s228 = int_to_ptr.vmem [resolvable:$true] %s227
          %230 = dma.hbm_to_vmem [thread:$0]  %s0, 128, %s228, [#allocation4]
        $region16: #{tpu_custom_call.1} parent=11 // pred_fallthru
          _
        // Predicated region
        $region17: #{tpu_custom_call.1} parent=11 // pred_check
          %p231 = pneg %p58
        $region18: #{tpu_custom_call.1} parent=11 // pred_check_branch
          %233 = sbr.rel (%p231) target = $region20
        $region19: #{tpu_custom_call.1} parent=11 // pred_region
          %s235 = ssub.s32 1024, 1024
          %236 = vsyncadd [#allocation7], %s235
          %s237 = sshll.u32 [#allocation6], 4
          %s238 = int_to_ptr.vmem [resolvable:$true] %s237
          %243 = dma.hbm_to_vmem [thread:$0]  %s1, 1024, %s238, [#allocation7], 64, 64, 4
        $region20: #{tpu_custom_call.1} parent=11 // pred_fallthru
          _
        // Predicated region
        $region21: #{tpu_custom_call.1} parent=11 // pred_check
          %p244 = pneg %p163
        $region22: #{tpu_custom_call.1} parent=11 // pred_check_branch
          %246 = sbr.rel (%p244) target = $region24
        $region23: #{tpu_custom_call.1} parent=11 // pred_region
          %s248 = ssub.s32 1024, 1024
          %249 = vsyncadd [#allocation7], %s248
          %s250 = sshll.u32 [#allocation9], 4
          %s251 = int_to_ptr.vmem [resolvable:$true] %s250
          %256 = dma.hbm_to_vmem [thread:$0]  %s5, 1024, %s251, [#allocation7], 64, 64, 4
        $region24: #{tpu_custom_call.1} parent=11 // pred_fallthru
          _
        // Predicated region
        $region25: #{tpu_custom_call.1} parent=11 // pred_check
          %p257 = pneg %p184
        $region26: #{tpu_custom_call.1} parent=11 // pred_check_branch
          %259 = sbr.rel (%p257) target = $region28
        $region27: #{tpu_custom_call.1} parent=11 // pred_region
          _
        $region28: #{tpu_custom_call.1} parent=11 // pred_fallthru
          _
      $region12: #{tpu_custom_call.1} parent=5 // pred_fallthru
        _
      %p260 = scmp.lt.s32.totalorder %s16, 3
      // Predicated region
      $region29: #{tpu_custom_call.1} parent=5 // pred_check
        %p261 = pneg %p260
      $region30: #{tpu_custom_call.1} parent=5 // pred_check_branch
        %263 = sbr.rel (%p261) target = $region32
      $region31: #{tpu_custom_call.1} parent=5 // pred_region
        // Predicated region
        $region33: #{tpu_custom_call.1} parent=31 // pred_check
          %p264 = pneg %p84
        $region34: #{tpu_custom_call.1} parent=31 // pred_check_branch
          %266 = sbr.rel (%p264) target = $region36
        $region35: #{tpu_custom_call.1} parent=31 // pred_region
          %s267 = sand.u32 %s16, 1
          %s268 = scalar_lea.sflag [#allocation4], %s267
          %s269 = sand.u32 %s74, 1
          %s270 = smul.addr %s269, 64
          %s271 = scalar_lea.vmem [#allocation8], %s270
          %s272 = ssub.s32 %s16, 1
          %p273 = scmp.gt.s32.totalorder %s272, 0
          %s274 = scalar_select %p273, %s272, 0
          %s276 = ssub.s32 1024, 1024
          %277 = vsyncadd %s268, %s276
          %s278 = smul.addr %s274, 16
          %s279 = smul.addr %s278, 64
          %s280 = scalar_lea.hbm %s2, %s279
          %s281 = sshll.u32 %s271, 4
          %s282 = int_to_ptr.vmem [resolvable:$true] %s281
          %287 = dma.hbm_to_vmem [thread:$0]  %s280, 1024, %s282, %s268, 64, 64, 4
        $region36: #{tpu_custom_call.1} parent=31 // pred_fallthru
          _
        // Predicated region
        $region37: #{tpu_custom_call.1} parent=31 // pred_check
          %p288 = pneg %p110
        $region38: #{tpu_custom_call.1} parent=31 // pred_check_branch
          %290 = sbr.rel (%p288) target = $region40
        $region39: #{tpu_custom_call.1} parent=31 // pred_region
          %p291 = scmp.lt.s32.totalorder %s16, 2
          %s292 = scalar_select %p291, %s16, 2
          %s293 = scalar_lea.vmem %s3, %s292
        $region40: #{tpu_custom_call.1} parent=31 // pred_fallthru
          _
        // Predicated region
        $region41: #{tpu_custom_call.1} parent=31 // pred_check
          %p294 = pneg %p136
        $region42: #{tpu_custom_call.1} parent=31 // pred_check_branch
          %296 = sbr.rel (%p294) target = $region44
        $region43: #{tpu_custom_call.1} parent=31 // pred_region
          %p297 = scmp.lt.s32.totalorder %s16, 2
          %s298 = scalar_select %p297, %s16, 2
          %s299 = scalar_lea.vmem %s4, %s298
        $region44: #{tpu_custom_call.1} parent=31 // pred_fallthru
          _
      $region32: #{tpu_custom_call.1} parent=5 // pred_fallthru
        _
      %p300 = scmp.le.s32.totalorder 1, %s16
      %p301 = scmp.lt.s32.totalorder %s16, 4
      %p302 = pnand %p300, %p301
      %p303 = pneg %p302
      // Predicated region
      $region45: #{tpu_custom_call.1} parent=5 // pred_check
        _
      $region46: #{tpu_custom_call.1} parent=5 // pred_check_branch
        %305 = sbr.rel (%p302) target = $region48
      $region47: #{tpu_custom_call.1} parent=5 // pred_region
        %s306 = ssub.s32 %s16, 1
        // Predicated region
        $region49: #{tpu_custom_call.1} parent=47 // pred_check
          %p307 = pneg %p37
        $region50: #{tpu_custom_call.1} parent=47 // pred_check_branch
          %309 = sbr.rel (%p307) target = $region52
        $region51: #{tpu_custom_call.1} parent=47 // pred_region
          %310 = dma.done [#allocation4], 128
        $region52: #{tpu_custom_call.1} parent=47 // pred_fallthru
          _
        // Predicated region
        $region53: #{tpu_custom_call.1} parent=47 // pred_check
          %p311 = pneg %p58
        $region54: #{tpu_custom_call.1} parent=47 // pred_check_branch
          %313 = sbr.rel (%p311) target = $region56
        $region55: #{tpu_custom_call.1} parent=47 // pred_region
          %314 = dma.done [#allocation7], 1024
        $region56: #{tpu_custom_call.1} parent=47 // pred_fallthru
          _
        %s315 = sand.u32 %s21, 1
        %s316 = scalar_lea.sflag [#allocation4], %s315
        %s317 = sand.u32 %s77, 1
        %s318 = smul.addr %s317, 64
        %s319 = scalar_lea.vmem [#allocation8], %s318
        // Predicated region
        $region57: #{tpu_custom_call.1} parent=47 // pred_check
          %p320 = pneg %p90
        $region58: #{tpu_custom_call.1} parent=47 // pred_check_branch
          %322 = sbr.rel (%p320) target = $region60
        $region59: #{tpu_custom_call.1} parent=47 // pred_region
          %323 = dma.done %s316, 1024
        $region60: #{tpu_custom_call.1} parent=47 // pred_fallthru
          _
        // Predicated region
        $region61: #{tpu_custom_call.1} parent=47 // pred_check
          %p324 = pneg %p163
        $region62: #{tpu_custom_call.1} parent=47 // pred_check_branch
          %326 = sbr.rel (%p324) target = $region64
        $region63: #{tpu_custom_call.1} parent=47 // pred_region
          %327 = dma.done [#allocation7], 1024
        $region64: #{tpu_custom_call.1} parent=47 // pred_fallthru
          _
        %p328 = pneg %p37
        %p329 = pneg %p34
        %p330 = pneg %p58
        %p331 = pneg %p55
        %s332 = sand.u32 %s21, 1
        %s333 = scalar_lea.sflag [#allocation4], %s332
        %s334 = sand.u32 %s77, 1
        %s335 = smul.addr %s334, 64
        %s336 = scalar_lea.vmem [#allocation8], %s335
        %p337 = pneg %p90
        %p338 = pneg %p87
        %p339 = scmp.lt.s32.totalorder %s21, 2
        %s340 = scalar_select %p339, %s21, 2
        %s341 = scalar_lea.vmem %s3, %s340
        %p342 = pneg %p116
        %p343 = pneg %p113
        %p344 = scmp.lt.s32.totalorder %s21, 2
        %s345 = scalar_select %p344, %s21, 2
        %s346 = scalar_lea.vmem %s4, %s345
        %p347 = pneg %p142
        %p348 = pneg %p139
        %p349 = pneg %p163
        %p350 = pneg %p160
        %p351 = pneg %p184
        %p352 = pneg %p181
        %p353 = pneg %p205
        %p354 = pneg %p202
        %s355 = ssub.s32 %s21, 1
        %p356 = scmp.gt.s32.totalorder %s355, 0
        %s357 = scalar_select %p356, %s355, 0
        %p358 = scmp.lt.s32.totalorder %s21, 2
        %s359 = scalar_select %p358, %s21, 2
        %s360 = scalar_lea.vmem %s3, %s359
        %p361 = scmp.lt.s32.totalorder %s21, 2
        %s362 = scalar_select %p361, %s21, 2
        %s363 = scalar_lea.vmem %s4, %s362
        %v365 = vld [vmem:[%s360] sm:$0x1]
        %v366 = vld [vmem:[%s363] sm:$0x1]
        %p367 = scmp.eq.s32.totalorder %s21, 0
        // Predicated region
        $region65: #{tpu_custom_call.1} parent=47 // pred_check
          %p368 = pneg %p367
        $region66: #{tpu_custom_call.1} parent=47 // pred_check_branch
          %370 = sbr.rel (%p368) target = $region68
        $region67: #{tpu_custom_call.1} parent=47 // pred_region
          %v371 = vld [vmem:[#allocation3] sm:$0xff]
          %v372 = vpack.c.bf16 %v371, %v371
          %v373 = vld [vmem:[#allocation6] sm:$0xf]
          %v374 = vld [vmem:[#allocation6 + $0x4] sm:$0xf]
          %v375 = vld [vmem:[#allocation6 + $0x8] sm:$0xf]
          %v376 = vld [vmem:[#allocation6 + $0xc] sm:$0xf]
          %v377 = vld [vmem:[#allocation6 + $0x10] sm:$0xf]
          %v378 = vld [vmem:[#allocation6 + $0x14] sm:$0xf]
          %v379 = vld [vmem:[#allocation6 + $0x18] sm:$0xf]
          %v380 = vld [vmem:[#allocation6 + $0x1c] sm:$0xf]
          %v381 = vld [vmem:[#allocation6 + $0x20] sm:$0xf]
          %v382 = vld [vmem:[#allocation6 + $0x24] sm:$0xf]
          %v383 = vld [vmem:[#allocation6 + $0x28] sm:$0xf]
          %v384 = vld [vmem:[#allocation6 + $0x2c] sm:$0xf]
          %v385 = vld [vmem:[#allocation6 + $0x30] sm:$0xf]
          %v386 = vld [vmem:[#allocation6 + $0x34] sm:$0xf]
          %v387 = vld [vmem:[#allocation6 + $0x38] sm:$0xf]
          %v388 = vld [vmem:[#allocation6 + $0x3c] sm:$0xf]
          %v405 = vunpack.c.l.b16 %v373
          %v406 = vunpack.c.l.b16 %v374
          %v407 = vunpack.c.l.b16 %v375
          %v408 = vunpack.c.l.b16 %v376
          %v409 = vunpack.c.l.b16 %v377
          %v410 = vunpack.c.l.b16 %v378
          %v411 = vunpack.c.l.b16 %v379
          %v412 = vunpack.c.l.b16 %v380
          %v413 = vunpack.c.l.b16 %v381
          %v414 = vunpack.c.l.b16 %v382
          %v415 = vunpack.c.l.b16 %v383
          %v416 = vunpack.c.l.b16 %v384
          %v417 = vunpack.c.l.b16 %v385
          %v418 = vunpack.c.l.b16 %v386
          %v419 = vunpack.c.l.b16 %v387
          %v420 = vunpack.c.l.b16 %v388
          %v421 = vpack.c.b16 %v406, %v405
          %v422 = vpack.c.b16 %v408, %v407
          %v423 = vpack.c.b16 %v410, %v409
          %v424 = vpack.c.b16 %v412, %v411
          %v425 = vpack.c.b16 %v414, %v413
          %v426 = vpack.c.b16 %v416, %v415
          %v427 = vpack.c.b16 %v418, %v417
          %v428 = vpack.c.b16 %v420, %v419
          %437 = vmatprep.subr.bf16.mxu0 0
          %438 = vmatpush1.bf16.msra.mxu0 %v428
          %439 = vmatprep.subr.bf16.mxu0 0
          %440 = vmatpush1.bf16.msra.mxu0 %v427
          %441 = vmatprep.subr.bf16.mxu0 0
          %442 = vmatpush1.bf16.msra.mxu0 %v426
          %443 = vmatprep.subr.bf16.mxu0 0
          %444 = vmatpush1.bf16.msra.mxu0 %v425
          %445 = vmatprep.subr.bf16.mxu0 0
          %446 = vmatpush1.bf16.msra.mxu0 %v424
          %447 = vmatprep.subr.bf16.mxu0 0
          %448 = vmatpush1.bf16.msra.mxu0 %v423
          %449 = vmatprep.subr.bf16.mxu0 0
          %450 = vmatpush1.bf16.msra.mxu0 %v422
          %451 = vmatprep.subr.bf16.mxu0 0
          %452 = vmatpush1.bf16.msra.mxu0 %v421
          %453 = vmatprep.subr.bf16.mxu0 0
          %454 = vmatpush2.bf16.msra.mxu0 0
          %455 = vmatprep.subr.bf16.mxu0 0
          %456 = vmatpush2.bf16.msra.mxu0 0
          %457 = vmatprep.subr.bf16.mxu0 0
          %458 = vmatpush2.bf16.msra.mxu0 0
          %459 = vmatprep.subr.bf16.mxu0 0
          %460 = vmatpush2.bf16.msra.mxu0 0
          %461 = vmatprep.subr.bf16.mxu0 0
          %462 = vmatpush2.bf16.msra.mxu0 0
          %463 = vmatprep.subr.bf16.mxu0 0
          %464 = vmatpush2.bf16.msra.mxu0 0
          %465 = vmatprep.subr.bf16.mxu0 0
          %466 = vmatpush2.bf16.msra.mxu0 0
          %467 = vmatprep.subr.bf16.mxu0 0
          %468 = vmatpush2.bf16.msra.mxu0 0
          %469 = vmatprep.mubr.bf16.mxu0 0
          %470 = vmatmul.mubr.bf16.gmra.mxu0 %v372
          %v471 = vpop.f32.mrf.mxu0
          %v472 = vadd.f32 0.0, %v471
          %v473 = vpop.f32.mrf.mxu0
          %v474 = vpop.f32.mrf.mxu0
          %v475 = vpop.f32.mrf.mxu0
          %476 = vdwg.mxu0
          %v477 = vrot.slane %v472, 4
          %v478 = vadd.f32 %v472, %v477
          %v479 = vrot.slane %v478, 2
          %v480 = vadd.f32 %v478, %v479
          %v481 = vrot.slane %v480, 1
          %v482 = vadd.f32 %v480, %v481
          %v483 = vrcp.pop 8.0
          %v484 = vmul.f32 %v482, %v483
          %v485 = vmul.f32 %v472, %v472
          %v486 = vrot.slane %v485, 4
          %v487 = vadd.f32 %v485, %v486
          %v488 = vrot.slane %v487, 2
          %v489 = vadd.f32 %v487, %v488
          %v490 = vrot.slane %v489, 1
          %v491 = vadd.f32 %v489, %v490
          %v492 = vmul.f32 %v491, %v483
          %v493 = vmul.f32 %v484, %v484
          %v494 = vsub.f32 %v492, %v493
          %v495 = vmax.f32 %v494, 0.0
          %v496 = vadd.f32 %v495, 1e-05
          %v497 = vrsqrt.pop %v496
          %v498 = vmul.f32 %v365, %v497
          %v499 = vmul.f32 %v484, %v498
          %v500 = vsub.f32 %v366, %v499
          %v502 = vlaneseq
          %v503 = vshrl.u32 %v502, 7
          %v504 = vsub.s32 0, %v503
          %v505 = vrot.slane %v498, %v504
          %v507 = vmul.f32 %v472, %v505
          %v509 = vlaneseq
          %v510 = vshrl.u32 %v509, 7
          %v511 = vsub.s32 0, %v510
          %v512 = vrot.slane %v500, %v511
          %v514 = vadd.f32 %v507, %v512
          %v515 = vmax.f32 %v514, 0.0
          %v516 = vpack.c.bf16 %v515, %v515
          %517 = vst [vmem:[#allocation2] sm:$0xf] %v516
        $region68: #{tpu_custom_call.1} parent=47 // pred_fallthru
          _
        %p518 = scmp.gt.s32.totalorder %s21, 0
        // Predicated region
        $region69: #{tpu_custom_call.1} parent=47 // pred_check
          %p519 = pneg %p518
        $region70: #{tpu_custom_call.1} parent=47 // pred_check_branch
          %521 = sbr.rel (%p519) target = $region72
        $region71: #{tpu_custom_call.1} parent=47 // pred_region
          %v522 = vld [vmem:[#allocation2] sm:$0xf]
          %v523 = vld [vmem:[%s319] sm:$0xf]
          %v524 = vld [vmem:[%s319 + $0x4] sm:$0xf]
          %v525 = vld [vmem:[%s319 + $0x8] sm:$0xf]
          %v526 = vld [vmem:[%s319 + $0xc] sm:$0xf]
          %v527 = vld [vmem:[%s319 + $0x10] sm:$0xf]
          %v528 = vld [vmem:[%s319 + $0x14] sm:$0xf]
          %v529 = vld [vmem:[%s319 + $0x18] sm:$0xf]
          %v530 = vld [vmem:[%s319 + $0x1c] sm:$0xf]
          %v531 = vld [vmem:[%s319 + $0x20] sm:$0xf]
          %v532 = vld [vmem:[%s319 + $0x24] sm:$0xf]
          %v533 = vld [vmem:[%s319 + $0x28] sm:$0xf]
          %v534 = vld [vmem:[%s319 + $0x2c] sm:$0xf]
          %v535 = vld [vmem:[%s319 + $0x30] sm:$0xf]
          %v536 = vld [vmem:[%s319 + $0x34] sm:$0xf]
          %v537 = vld [vmem:[%s319 + $0x38] sm:$0xf]
          %v538 = vld [vmem:[%s319 + $0x3c] sm:$0xf]
          %v555 = vunpack.c.l.b16 %v523
          %v556 = vunpack.c.l.b16 %v524
          %v557 = vunpack.c.l.b16 %v525
          %v558 = vunpack.c.l.b16 %v526
          %v559 = vunpack.c.l.b16 %v527
          %v560 = vunpack.c.l.b16 %v528
          %v561 = vunpack.c.l.b16 %v529
          %v562 = vunpack.c.l.b16 %v530
          %v563 = vunpack.c.l.b16 %v531
          %v564 = vunpack.c.l.b16 %v532
          %v565 = vunpack.c.l.b16 %v533
          %v566 = vunpack.c.l.b16 %v534
          %v567 = vunpack.c.l.b16 %v535
          %v568 = vunpack.c.l.b16 %v536
          %v569 = vunpack.c.l.b16 %v537
          %v570 = vunpack.c.l.b16 %v538
          %v571 = vpack.c.b16 %v556, %v555
          %v572 = vpack.c.b16 %v558, %v557
          %v573 = vpack.c.b16 %v560, %v559
          %v574 = vpack.c.b16 %v562, %v561
          %v575 = vpack.c.b16 %v564, %v563
          %v576 = vpack.c.b16 %v566, %v565
          %v577 = vpack.c.b16 %v568, %v567
          %v578 = vpack.c.b16 %v570, %v569
          %587 = vmatprep.subr.bf16.mxu0 0
          %588 = vmatpush1.bf16.msra.mxu0 %v578
          %589 = vmatprep.subr.bf16.mxu0 0
          %590 = vmatpush1.bf16.msra.mxu0 %v577
          %591 = vmatprep.subr.bf16.mxu0 0
          %592 = vmatpush1.bf16.msra.mxu0 %v576
          %593 = vmatprep.subr.bf16.mxu0 0
          %594 = vmatpush1.bf16.msra.mxu0 %v575
          %595 = vmatprep.subr.bf16.mxu0 0
          %596 = vmatpush1.bf16.msra.mxu0 %v574
          %597 = vmatprep.subr.bf16.mxu0 0
          %598 = vmatpush1.bf16.msra.mxu0 %v573
          %599 = vmatprep.subr.bf16.mxu0 0
          %600 = vmatpush1.bf16.msra.mxu0 %v572
          %601 = vmatprep.subr.bf16.mxu0 0
          %602 = vmatpush1.bf16.msra.mxu0 %v571
          %603 = vmatprep.subr.bf16.mxu0 0
          %604 = vmatpush2.bf16.msra.mxu0 0
          %605 = vmatprep.subr.bf16.mxu0 0
          %606 = vmatpush2.bf16.msra.mxu0 0
          %607 = vmatprep.subr.bf16.mxu0 0
          %608 = vmatpush2.bf16.msra.mxu0 0
          %609 = vmatprep.subr.bf16.mxu0 0
          %610 = vmatpush2.bf16.msra.mxu0 0
          %611 = vmatprep.subr.bf16.mxu0 0
          %612 = vmatpush2.bf16.msra.mxu0 0
          %613 = vmatprep.subr.bf16.mxu0 0
          %614 = vmatpush2.bf16.msra.mxu0 0
          %615 = vmatprep.subr.bf16.mxu0 0
          %616 = vmatpush2.bf16.msra.mxu0 0
          %617 = vmatprep.subr.bf16.mxu0 0
          %618 = vmatpush2.bf16.msra.mxu0 0
          %619 = vmatprep.mubr.bf16.mxu0 0
          %620 = vmatmul.mubr.bf16.gmra.mxu0 %v522
          %v621 = vpop.f32.mrf.mxu0
          %v622 = vadd.f32 0.0, %v621
          %v623 = vpop.f32.mrf.mxu0
          %v624 = vpop.f32.mrf.mxu0
          %v625 = vpop.f32.mrf.mxu0
          %626 = vdwg.mxu0
          %v627 = vrot.slane %v622, 4
          %v628 = vadd.f32 %v622, %v627
          %v629 = vrot.slane %v628, 2
          %v630 = vadd.f32 %v628, %v629
          %v631 = vrot.slane %v630, 1
          %v632 = vadd.f32 %v630, %v631
          %v633 = vrcp.pop 8.0
          %v634 = vmul.f32 %v632, %v633
          %v635 = vmul.f32 %v622, %v622
          %v636 = vrot.slane %v635, 4
          %v637 = vadd.f32 %v635, %v636
          %v638 = vrot.slane %v637, 2
          %v639 = vadd.f32 %v637, %v638
          %v640 = vrot.slane %v639, 1
          %v641 = vadd.f32 %v639, %v640
          %v642 = vmul.f32 %v641, %v633
          %v643 = vmul.f32 %v634, %v634
          %v644 = vsub.f32 %v642, %v643
          %v645 = vmax.f32 %v644, 0.0
          %v646 = vadd.f32 %v645, 1e-05
          %v647 = vrsqrt.pop %v646
          %v648 = vmul.f32 %v365, %v647
          %v649 = vmul.f32 %v634, %v648
          %v650 = vsub.f32 %v366, %v649
          %v652 = vlaneseq
          %v653 = vshrl.u32 %v652, 7
          %v654 = vsub.s32 0, %v653
          %v655 = vrot.slane %v648, %v654
          %v657 = vmul.f32 %v622, %v655
          %v659 = vlaneseq
          %v660 = vshrl.u32 %v659, 7
          %v661 = vsub.s32 0, %v660
          %v662 = vrot.slane %v650, %v661
          %v664 = vadd.f32 %v657, %v662
          %v665 = vmax.f32 %v664, 0.0
          %v666 = vpack.c.bf16 %v665, %v665
          %667 = vst [vmem:[#allocation2] sm:$0xf] %v666
        $region72: #{tpu_custom_call.1} parent=47 // pred_fallthru
          _
        %p668 = scmp.eq.s32.totalorder %s21, 2
        // Predicated region
        $region73: #{tpu_custom_call.1} parent=47 // pred_check
          %p669 = pneg %p668
        $region74: #{tpu_custom_call.1} parent=47 // pred_check_branch
          %671 = sbr.rel (%p669) target = $region76
        $region75: #{tpu_custom_call.1} parent=47 // pred_region
          %v672 = vld [vmem:[#allocation2] sm:$0xf]
          %v673 = vld [vmem:[#allocation9] sm:$0xf]
          %v674 = vld [vmem:[#allocation9 + $0x4] sm:$0xf]
          %v675 = vld [vmem:[#allocation9 + $0x8] sm:$0xf]
          %v676 = vld [vmem:[#allocation9 + $0xc] sm:$0xf]
          %v677 = vld [vmem:[#allocation9 + $0x10] sm:$0xf]
          %v678 = vld [vmem:[#allocation9 + $0x14] sm:$0xf]
          %v679 = vld [vmem:[#allocation9 + $0x18] sm:$0xf]
          %v680 = vld [vmem:[#allocation9 + $0x1c] sm:$0xf]
          %v681 = vld [vmem:[#allocation9 + $0x20] sm:$0xf]
          %v682 = vld [vmem:[#allocation9 + $0x24] sm:$0xf]
          %v683 = vld [vmem:[#allocation9 + $0x28] sm:$0xf]
          %v684 = vld [vmem:[#allocation9 + $0x2c] sm:$0xf]
          %v685 = vld [vmem:[#allocation9 + $0x30] sm:$0xf]
          %v686 = vld [vmem:[#allocation9 + $0x34] sm:$0xf]
          %v687 = vld [vmem:[#allocation9 + $0x38] sm:$0xf]
          %v688 = vld [vmem:[#allocation9 + $0x3c] sm:$0xf]
          %v689 = vld [vmem:[%s6] sm:$0x1]
          %v691 = vlaneseq
          %v692 = vshrl.u32 %v691, 7
          %v693 = vsub.s32 0, %v692
          %v694 = vrot.slane %v689, %v693
          %v712 = vunpack.c.l.b16 %v673
          %v713 = vunpack.c.l.b16 %v674
          %v714 = vunpack.c.l.b16 %v675
          %v715 = vunpack.c.l.b16 %v676
          %v716 = vunpack.c.l.b16 %v677
          %v717 = vunpack.c.l.b16 %v678
          %v718 = vunpack.c.l.b16 %v679
          %v719 = vunpack.c.l.b16 %v680
          %v720 = vunpack.c.l.b16 %v681
          %v721 = vunpack.c.l.b16 %v682
          %v722 = vunpack.c.l.b16 %v683
          %v723 = vunpack.c.l.b16 %v684
          %v724 = vunpack.c.l.b16 %v685
          %v725 = vunpack.c.l.b16 %v686
          %v726 = vunpack.c.l.b16 %v687
          %v727 = vunpack.c.l.b16 %v688
          %v728 = vpack.c.b16 %v713, %v712
          %v729 = vpack.c.b16 %v715, %v714
          %v730 = vpack.c.b16 %v717, %v716
          %v731 = vpack.c.b16 %v719, %v718
          %v732 = vpack.c.b16 %v721, %v720
          %v733 = vpack.c.b16 %v723, %v722
          %v734 = vpack.c.b16 %v725, %v724
          %v735 = vpack.c.b16 %v727, %v726
          %744 = vmatprep.subr.bf16.mxu0 0
          %745 = vmatpush1.bf16.msra.mxu0 %v735
          %746 = vmatprep.subr.bf16.mxu0 0
          %747 = vmatpush1.bf16.msra.mxu0 %v734
          %748 = vmatprep.subr.bf16.mxu0 0
          %749 = vmatpush1.bf16.msra.mxu0 %v733
          %750 = vmatprep.subr.bf16.mxu0 0
          %751 = vmatpush1.bf16.msra.mxu0 %v732
          %752 = vmatprep.subr.bf16.mxu0 0
          %753 = vmatpush1.bf16.msra.mxu0 %v731
          %754 = vmatprep.subr.bf16.mxu0 0
          %755 = vmatpush1.bf16.msra.mxu0 %v730
          %756 = vmatprep.subr.bf16.mxu0 0
          %757 = vmatpush1.bf16.msra.mxu0 %v729
          %758 = vmatprep.subr.bf16.mxu0 0
          %759 = vmatpush1.bf16.msra.mxu0 %v728
          %760 = vmatprep.subr.bf16.mxu0 0
          %761 = vmatpush2.bf16.msra.mxu0 0
          %762 = vmatprep.subr.bf16.mxu0 0
          %763 = vmatpush2.bf16.msra.mxu0 0
          %764 = vmatprep.subr.bf16.mxu0 0
          %765 = vmatpush2.bf16.msra.mxu0 0
          %766 = vmatprep.subr.bf16.mxu0 0
          %767 = vmatpush2.bf16.msra.mxu0 0
          %768 = vmatprep.subr.bf16.mxu0 0
          %769 = vmatpush2.bf16.msra.mxu0 0
          %770 = vmatprep.subr.bf16.mxu0 0
          %771 = vmatpush2.bf16.msra.mxu0 0
          %772 = vmatprep.subr.bf16.mxu0 0
          %773 = vmatpush2.bf16.msra.mxu0 0
          %774 = vmatprep.subr.bf16.mxu0 0
          %775 = vmatpush2.bf16.msra.mxu0 0
          %776 = vmatprep.mubr.bf16.mxu0 0
          %777 = vmatmul.mubr.bf16.gmra.mxu0 %v672
          %v778 = vpop.f32.mrf.mxu0
          %v779 = vadd.f32 %v694, %v778
          %v780 = vpop.f32.mrf.mxu0
          %v781 = vpop.f32.mrf.mxu0
          %v782 = vpop.f32.mrf.mxu0
          %783 = vdwg.mxu0
          %784 = vst [vmem:[#allocation10] sm:$0xff] %v779
        $region76: #{tpu_custom_call.1} parent=47 // pred_fallthru
          _
        // Predicated region
        $region77: #{tpu_custom_call.1} parent=47 // pred_check
          %p785 = pneg %p202
        $region78: #{tpu_custom_call.1} parent=47 // pred_check_branch
          %787 = sbr.rel (%p785) target = $region80
        $region79: #{tpu_custom_call.1} parent=47 // pred_region
          %s789 = ssub.s32 128, 128
          %790 = vsyncadd [#allocation5], %s789
          %s792 = sshll.u32 [#allocation10], 4
          %s793 = int_to_ptr.vmem [resolvable:$true] %s792
          %795 = dma.vmem_to_hbm [thread:$0]  %s793, 128, %s7, [#allocation5]
        $region80: #{tpu_custom_call.1} parent=47 // pred_fallthru
          _
        // Predicated region
        $region81: #{tpu_custom_call.1} parent=47 // pred_check
          %p796 = pneg %p202
        $region82: #{tpu_custom_call.1} parent=47 // pred_check_branch
          %798 = sbr.rel (%p796) target = $region84
        $region83: #{tpu_custom_call.1} parent=47 // pred_region
          %799 = dma.done [#allocation5], 128
        $region84: #{tpu_custom_call.1} parent=47 // pred_fallthru
          _
      $region48: #{tpu_custom_call.1} parent=5 // pred_fallthru
        _
      %p800 = scmp.le.s32.totalorder 2, %s16
      // Predicated region
      $region85: #{tpu_custom_call.1} parent=5 // pred_check
        %p801 = pneg %p800
      $region86: #{tpu_custom_call.1} parent=5 // pred_check_branch
        %803 = sbr.rel (%p801) target = $region88
      $region87: #{tpu_custom_call.1} parent=5 // pred_region
        %s804 = ssub.s32 %s16, 2
      $region88: #{tpu_custom_call.1} parent=5 // pred_fallthru
        _
    $region6: #{tpu_custom_call.1} parent=1 // loop_footer
      %s20 = sadd.s32 1, %s16
    $region7: #{tpu_custom_call.1} parent=1 // loop_footer_branch
      %15 = sbr.rel target = $region3
    $region8: #{tpu_custom_call.1} parent=1 // loop_exit
      _
    %805 = vsyncpa [#allocation4], 1
    %s806 = scalar_lea.sflag [#allocation4], 1
    %807 = vsyncpa %s806, 1
    %808 = vsyncpa [#allocation7], 1
    %809 = vsyncpa [#allocation5], 1
    %s810 = scalar_lea.sflag [#allocation5], 1
    %811 = vsyncpa %s810, 1

</llo_original>
